<compile_context>
chip_gen: v5e
topology: v5e:2x2
jax: 0.10.0
libtpu: 0.0.40
codegen_flags: <defaults>
</compile_context>

<pallas_src>
import functools

import jax
import jax.numpy as jnp
from jax.experimental import pallas as pl
from jax.experimental.pallas import tpu as pltpu


# ---------------------------------------------------------------------------
# Kernel
# ---------------------------------------------------------------------------
def _poslinear_kernel(x_ref, w_ref, o_ref):
    # x_ref: (TM, TK) f32, w_ref: (1, TK) f32, o_ref: (TM, 1) f32.
    k = pl.program_id(1)

    @pl.when(k == 0)
    def _init():
        o_ref[...] = jnp.zeros_like(o_ref)

    w = jnp.maximum(w_ref[...], 0.0)  # relu(weights), (1, TK), VPU
    # VPU elementwise multiply + cross-lane reduce over the feature axis.
    # (Avoids the N=1 MXU matmul and the per-tile transpose of the old kernel.)
    o_ref[...] += jnp.sum(x_ref[...] * w, axis=-1, keepdims=True)


# ---------------------------------------------------------------------------
# Tiling heuristics
# ---------------------------------------------------------------------------
def _round_up(x: int, m: int) -> int:
    return ((x + m - 1) // m) * m


def _choose_tiles(B: int, D: int):
    """Pick (TM, TK, B_pad, D_pad) under a conservative VMEM budget."""
    TK_MAX = 2048  # multiple of 128; K is tiled only when D is very large
    if D <= TK_MAX:
        tk, d_pad = D, D           # full-D block: exempt from the 128 rule
    else:
        tk = TK_MAX
        d_pad = _round_up(D, tk)

    # Double-buffered X tiles (2 * TM * TK * 4B) must fit the budget; this
    # keeps us well under the default scoped VMEM on v6e/v7x and is explicit
    # via vmem_limit_bytes below.
    x_tile_budget = 16 * 1024 * 1024
    tm = x_tile_budget // (2 * tk * 4)
    tm = max(8, min(1024, (tm // 8) * 8))
    if tm >= 256:
        tm = (tm // 256) * 256     # keep full-height MXU/MRB-friendly tiles

    b_pad8 = _round_up(B, 8)
    if b_pad8 <= tm:
        tm = b_pad8                # single batch tile, 8-aligned
        b_pad = b_pad8
    else:
        b_pad = _round_up(B, tm)
    return tm, tk, b_pad, d_pad


# ---------------------------------------------------------------------------
# Wrapper
# ---------------------------------------------------------------------------
@functools.partial(jax.jit, static_argnames=("force_pallas",))
def pos_linear(x: jax.Array, weights: jax.Array, *, force_pallas: bool = False):
    """x: (B, D) f32, weights: (D,) f32  ->  (B,) f32 == x @ relu(weights)."""
    x = x.astype(jnp.float32)
    weights = weights.astype(jnp.float32)
    B, D = x.shape

    # Tiny problems: pallas_call launch + per-step overhead dwarfs the data
    # movement; let XLA fuse relu+matvec instead (unless forced for testing).
    if not force_pallas and B * D < (1 << 16):
        return x @ jnp.maximum(weights, 0.0)

    tm, tk, b_pad, d_pad = _choose_tiles(B, D)

    x_p = x
    if (b_pad, d_pad) != (B, D):
        x_p = jnp.pad(x, ((0, b_pad - B), (0, d_pad - D)))
    w_p = weights if d_pad == D else jnp.pad(weights, (0, d_pad - D))
    w2d = w_p.reshape(1, d_pad)

    grid = (b_pad // tm, d_pad // tk)

    # VMEM actually needed: double-buffered X tile + weight row + output col.
    vmem_need = 2 * tm * tk * 4 + 2 * tk * 4 + 2 * tm * 4
    vmem_limit = int(min(vmem_need + (8 << 20), 48 << 20))  # headroom, v7x-safe

    out = pl.pallas_call(
        _poslinear_kernel,
        out_shape=jax.ShapeDtypeStruct((b_pad, 1), jnp.float32),
        grid=grid,
        in_specs=[
            pl.BlockSpec((tm, tk), lambda i, k: (i, k)),   # X tiles stream
            pl.BlockSpec((1, tk), lambda i, k: (0, k)),    # weights resident
        ],
        out_specs=pl.BlockSpec((tm, 1), lambda i, k: (i, 0)),
        compiler_params=pltpu.CompilerParams(
            dimension_semantics=("parallel", "arbitrary"),
            vmem_limit_bytes=vmem_limit,
        ),
    )(x_p, w2d)
    return out[:B, 0]


# ---------------------------------------------------------------------------
# Test
# ---------------------------------------------------------------------------
if __name__ == "__main__":
    key = jax.random.PRNGKey(0)
    k_x, k_w, k_x2 = jax.random.split(key, 3)

    batch, in_features = 8, 32

    # Deterministic param init matching torch.rand(in_features) + 0.1
    weights = jax.random.uniform(k_w, (in_features,), dtype=jnp.float32) + 0.1
    x = jax.random.normal(k_x, (batch, in_features), dtype=jnp.float32)

    y = pos_linear(x, weights, force_pallas=True)
    jax.block_until_ready(y)
    y_ref = x @ jnp.maximum(weights, 0.0)
    assert y.shape == (batch,)
    assert jnp.allclose(y, y_ref, atol=1e-5, rtol=1e-5)

    # Ragged shapes: exercises the pad-to-tile / slice-back path.
    b2, d2 = 13, 50
    w2 = jax.random.uniform(k_w, (d2,), dtype=jnp.float32) + 0.1
    x2 = jax.random.normal(k_x2, (b2, d2), dtype=jnp.float32)
    y2 = pos_linear(x2, w2, force_pallas=True)
    jax.block_until_ready(y2)
    y2_ref = x2 @ jnp.maximum(w2, 0.0)
    assert y2.shape == (b2,)
    assert jnp.allclose(y2, y2_ref, atol=1e-5, rtol=1e-5)

    print("KERNEL_OK")
</pallas_src>

<mosaic_0001>
module attributes {stable_mosaic.version = 11 : i64} {
  func.func @_poslinear_kernel(%arg0: i32, %arg1: i32, %arg2: memref<8x32xf32, #tpu.memory_space<vmem>>, %arg3: memref<1x32xf32, #tpu.memory_space<vmem>>, %arg4: memref<8x1xf32, #tpu.memory_space<vmem>>) attributes {dimension_semantics = [#tpu.dimension_semantics<parallel>, #tpu.dimension_semantics<arbitrary>], iteration_bounds = array<i64: 1, 1>, scalar_prefetch = 0 : i64, scratch_operands = 0 : i64, tpu.core_type = #tpu.core_type<tc>, window_params = [{transform_indices = @transform_0, window_bounds = array<i64: 8, 32>}, {transform_indices = @transform_1, window_bounds = array<i64: 1, 32>}, {transform_indices = @transform_2, window_bounds = array<i64: 8, 1>}]} {
    %c0_i32 = arith.constant 0 : i32
    %0 = arith.cmpi eq, %arg1, %c0_i32 : i32
    %1 = arith.extui %0 : i1 to i32
    %c0_i32_0 = arith.constant 0 : i32
    %2 = arith.cmpi ne, %1, %c0_i32_0 : i32
    scf.if %2 {
      %cst_9 = arith.constant 0.000000e+00 : f32
      %14 = vector.broadcast %cst_9 : f32 to vector<8x1xf32>
      %c0_10 = arith.constant 0 : index
      %c0_11 = arith.constant 0 : index
      %15 = vector.load %arg4[%c0_10, %c0_11] : memref<8x1xf32, #tpu.memory_space<vmem>>, vector<8x1xf32>
      tpu.vector_store %arg4[%c0_10, %c0_11], %14 {strides = array<i32>} : memref<8x1xf32, #tpu.memory_space<vmem>>, vector<8x1xf32>,
    } else {
    }
    %c0 = arith.constant 0 : index
    %c0_1 = arith.constant 0 : index
    %3 = vector.load %arg3[%c0, %c0_1] : memref<1x32xf32, #tpu.memory_space<vmem>>, vector<1x32xf32>
    %cst = arith.constant 0.000000e+00 : f32
    %4 = vector.broadcast %cst : f32 to vector<1x32xf32>
    %5 = arith.maximumf %3, %4 : vector<1x32xf32>
    %c0_2 = arith.constant 0 : index
    %c0_3 = arith.constant 0 : index
    %6 = vector.load %arg4[%c0_2, %c0_3] : memref<8x1xf32, #tpu.memory_space<vmem>>, vector<8x1xf32>
    %c0_4 = arith.constant 0 : index
    %c0_5 = arith.constant 0 : index
    %7 = vector.load %arg2[%c0_4, %c0_5] : memref<8x32xf32, #tpu.memory_space<vmem>>, vector<8x32xf32>
    %8 = vector.broadcast %5 : vector<1x32xf32> to vector<8x32xf32>
    %9 = arith.mulf %7, %8 : vector<8x32xf32>
    %cst_6 = arith.constant dense<0.000000e+00> : vector<8xf32>
    %10 = vector.multi_reduction <add>, %9, %cst_6 [1] : vector<8x32xf32> to vector<8xf32>
    %11 = vector.shape_cast %10 : vector<8xf32> to vector<8x1xf32>
    %12 = arith.addf %6, %11 : vector<8x1xf32>
    %c0_7 = arith.constant 0 : index
    %c0_8 = arith.constant 0 : index
    %13 = vector.load %arg4[%c0_7, %c0_8] : memref<8x1xf32, #tpu.memory_space<vmem>>, vector<8x1xf32>
    tpu.vector_store %arg4[%c0_7, %c0_8], %12 {strides = array<i32>} : memref<8x1xf32, #tpu.memory_space<vmem>>, vector<8x1xf32>,
    return
  }
  func.func @transform_0(%arg0: i32, %arg1: i32) -> (i32, i32) {
    %c0_i32 = arith.constant 0 : i32
    return %arg0, %arg1 : i32, i32
  }
  func.func @transform_1(%arg0: i32, %arg1: i32) -> (i32, i32) {
    %c0_i32 = arith.constant 0 : i32
    %c0_i32_0 = arith.constant 0 : i32
    return %c0_i32, %arg1 : i32, i32
  }
  func.func @transform_2(%arg0: i32, %arg1: i32) -> (i32, i32) {
    %c0_i32 = arith.constant 0 : i32
    %c0_i32_0 = arith.constant 0 : i32
    return %arg0, %c0_i32 : i32, i32
  }
}

</mosaic_0001>

<llo_original>
// kernel: pos_linear.1
$region0: #{pos_linear.1}
  #allocation0 [shape = 'u32[]', space=smem, size = 0x4, offset = 0x4, fixed_abs, tag = 'smem constant byte address 0x4 - core index']
  #allocation1 [shape = 'u32[72,128]{1,0:T(1,128)}', space=vmem, size = 0x9000, scoped, tag = 'internal scratch']
  %s0 = inlined_call_operand.hbm [shape: f32[8,32], index: 0, kind: input, shape index: {}]
  %s1 = inlined_call_operand.vmem [shape: f32[1,32], index: 1, kind: input, shape index: {}]
  %s2 = inlined_call_operand.vmem [shape: f32[8,1], index: 2, kind: output, shape index: {}]
  %s3 = sld [smem:[#allocation0]]
  $region26: #{pos_linear.1} parent=0
    _
  %s5 = ssub.s32 1, %s3
  %s6 = scalar_select 0, %s5, %s3
  $region1: #{pos_linear.1} parent=0
    #allocation2 [shape = 'u8[4096]{0}', space=vmem, size = 0x1000, scoped, tag = 'input window, operand 0, single buffered']
    #allocation3 [shape = 's32[1]{0}', space=sflag, size = 0x4, scoped, tag = 'scoped memory for pos_linear.1']
    %7 = vsyncpa [#allocation3], 0
    // Predicated region
    $region2: #{pos_linear.1} parent=1 // pred_check
      _
    $region3: #{pos_linear.1} parent=1 // pred_check_branch
      %9 = sbr.rel (0) target = $region5
    $region4: #{pos_linear.1} parent=1 // pred_region
      %11 = vsyncadd [#allocation3], 0
      %s13 = sshll.u32 %s0, 4
      %s14 = int_to_ptr.hbm [resolvable:$true] %s13
      %s15 = sshll.u32 [#allocation2], 4
      %s16 = int_to_ptr.vmem [resolvable:$true] %s15
      %18 = dma.hbm_to_vmem [thread:$0]  %s14, 128, %s16, [#allocation3]
    $region5: #{pos_linear.1} parent=1 // pred_fallthru
      _
    // Predicated region
    $region6: #{pos_linear.1} parent=1 // pred_check
      _
    $region7: #{pos_linear.1} parent=1 // pred_check_branch
      %20 = sbr.rel (0) target = $region9
    $region8: #{pos_linear.1} parent=1 // pred_region
      _
    $region9: #{pos_linear.1} parent=1 // pred_fallthru
      _
    // Predicated region
    $region10: #{pos_linear.1} parent=1 // pred_check
      _
    $region11: #{pos_linear.1} parent=1 // pred_check_branch
      %22 = sbr.rel (0) target = $region13
    $region12: #{pos_linear.1} parent=1 // pred_region
      %24 = dma.done [#allocation3], 128
    $region13: #{pos_linear.1} parent=1 // pred_fallthru
      _
    %p25 = scmp.eq.s32.totalorder 0, 0
    // Predicated region
    $region14: #{pos_linear.1} parent=1 // pred_check
      %p26 = pneg %p25
    $region15: #{pos_linear.1} parent=1 // pred_check_branch
      %28 = sbr.rel (%p26) target = $region17
    $region16: #{pos_linear.1} parent=1 // pred_region
      %vm29 = vcmask 7168
      %30 = vst.msk [vmem:[%s2] sm:$0xff] %vm29, 0.0
    $region17: #{pos_linear.1} parent=1 // pred_fallthru
      _
    %v31 = vld [vmem:[%s1] sm:$0x1]
    %v32 = vmax.f32 %v31, 0.0
    %v33 = vld [vmem:[%s2] sm:$0xff]
    %v34 = vld [vmem:[#allocation2] sm:$0xff]
    %v36 = vperm.slane %v32, 0
    %v38 = vmul.f32 %v34, %v36
    %vm39 = vcmask 261120
    %v40 = vsel %vm39, %v38, 0.0
    %41 = vadd.xlane.f32.xlu0 %v40
    %v42 = vpop.xlane.xlu0 %41
    %v43 = vadd.f32 %v33, %v42
    %vm44 = vcmask 7168
    %45 = vst.msk [vmem:[%s2] sm:$0xff] %vm44, %v43
    // Predicated region
    $region18: #{pos_linear.1} parent=1 // pred_check
      _
    $region19: #{pos_linear.1} parent=1 // pred_check_branch
      %47 = sbr.rel (0) target = $region21
    $region20: #{pos_linear.1} parent=1 // pred_region
      _
    $region21: #{pos_linear.1} parent=1 // pred_fallthru
      _
    // Predicated region
    $region22: #{pos_linear.1} parent=1 // pred_check
      _
    $region23: #{pos_linear.1} parent=1 // pred_check_branch
      %49 = sbr.rel (0) target = $region25
    $region24: #{pos_linear.1} parent=1 // pred_region
      _
    $region25: #{pos_linear.1} parent=1 // pred_fallthru
      _
    %50 = vsyncpa [#allocation3], 1

</llo_original>
